<compile_context>
chip_gen: v7x
topology: tpu7x:2x2x1
jax: 0.10.0
libtpu: 0.0.40
codegen_flags: <defaults>
</compile_context>

<pallas_src>
import functools

import jax
import jax.numpy as jnp
from jax.experimental import pallas as pl
from jax.experimental.pallas import tpu as pltpu

_NEG_INF = -1e30  # plain Python float -> becomes a jaxpr literal, never captured


def _round_up(x, m):
    return ((x + m - 1) // m) * m


def _choose_row_tile(n):
    """Rows per grid step: large lane-dense tiles amortize the ~0.35us/step
    overhead; multiple of 8 for sublane alignment."""
    if n >= 256:
        return 256
    return max(8, _round_up(n, 8))


def prepare_embed_table(embed):
    """Pad/cast the (V, V) table once at init time (hoisted out of forward)."""
    v_rows, v_cols = embed.shape
    v_rows_pad = _round_up(v_rows, 8)
    v_pad = _round_up(v_cols, 128)
    table = embed.astype(jnp.float32)
    table = jnp.pad(table, ((0, v_rows_pad - v_rows), (0, v_pad - v_cols)))
    return table


def _train_kernel(idx_ref, tgt_ref, table_ref, logits_ref, loss_ref,
                  *, v, v_rows_pad, v_pad, tm, n_rows):
    i = pl.program_id(0)

    @pl.when(i == 0)
    def _():
        loss_ref[...] = jnp.zeros_like(loss_ref)

    # Embedding lookup as a one-hot (tm, Vr) x (Vr, Vp) matmul on the MXU.
    # HIGHEST precision so the "gather" reproduces the f32 table rows exactly.
    row_col = jax.lax.broadcasted_iota(jnp.int32, (tm, v_rows_pad), 1)
    onehot = (row_col == idx_ref[...]).astype(jnp.float32)       # (tm, Vr)
    x = jnp.dot(onehot, table_ref[...],
                preferred_element_type=jnp.float32,
                precision=jax.lax.Precision.HIGHEST)              # (tm, Vp)
    logits_ref[...] = x        # lane-dense store; values stay in vregs for CE

    # Fused cross entropy; padded vocab lanes masked to -inf-ish.
    col = jax.lax.broadcasted_iota(jnp.int32, (tm, v_pad), 1)
    xm = jnp.where(col < v, x, _NEG_INF)
    m = jnp.max(xm, axis=-1, keepdims=True)
    lse = m + jnp.log(jnp.sum(jnp.exp(xm - m), axis=-1, keepdims=True))
    tgt = tgt_ref[...]                                            # (tm, 1) int32
    tgt_logit = jnp.sum(jnp.where(col == tgt, x, 0.0),
                        axis=-1, keepdims=True)
    nll = lse - tgt_logit                                         # (tm, 1)

    # Rows past the true B*T (row padding) contribute nothing.
    row_id = i * tm + jax.lax.broadcasted_iota(jnp.int32, (tm, 1), 0)
    nll = jnp.where(row_id < n_rows, nll, 0.0)
    loss_ref[...] = loss_ref[...] + jnp.sum(nll)

    @pl.when(i == pl.num_programs(0) - 1)
    def _():
        loss_ref[...] = loss_ref[...] * (1.0 / n_rows)


def _logits_kernel(idx_ref, table_ref, logits_ref, *, v_rows_pad, tm):
    row_col = jax.lax.broadcasted_iota(jnp.int32, (tm, v_rows_pad), 1)
    onehot = (row_col == idx_ref[...]).astype(jnp.float32)
    logits_ref[...] = jnp.dot(onehot, table_ref[...],
                              preferred_element_type=jnp.float32,
                              precision=jax.lax.Precision.HIGHEST)


def xpt_forward(idx, table, vocab_size, targets=None):
    """idx: (B, T) int tokens; table: padded (Vr_pad, V_pad) f32 from
    prepare_embed_table; vocab_size: true V."""
    B, T = idx.shape
    N = B * T
    v_rows_pad, v_pad = table.shape

    # Small-vocab fast path: whole table lives in VMEM for the entire call.
    assert v_rows_pad * v_pad * 4 <= 8 * 1024 * 1024, (
        "table too large for the VMEM-resident path")

    tm = _choose_row_tile(N)
    n_tiles = pl.cdiv(N, tm)
    N_pad = n_tiles * tm

    idx2d = idx.reshape(-1, 1).astype(jnp.int32)
    if N_pad != N:
        idx2d = jnp.pad(idx2d, ((0, N_pad - N), (0, 0)))

    table_spec = pl.BlockSpec((v_rows_pad, v_pad), lambda i: (0, 0))  # resident

    if targets is None:
        kernel = functools.partial(_logits_kernel, v_rows_pad=v_rows_pad, tm=tm)
        logits_pad = pl.pallas_call(
            kernel,
            out_shape=jax.ShapeDtypeStruct((N_pad, v_pad), jnp.float32),
            grid_spec=pltpu.PrefetchScalarGridSpec(
                num_scalar_prefetch=0,
                grid=(n_tiles,),
                in_specs=[
                    pl.BlockSpec((tm, 1), lambda i: (i, 0)),   # token ids
                    table_spec,                                # embed table
                ],
                out_specs=pl.BlockSpec((tm, v_pad), lambda i: (i, 0)),
            ),
            compiler_params=pltpu.CompilerParams(
                dimension_semantics=("parallel",)),
        )(idx2d, table)
        # PyTorch returns (B, T, V) logits and loss=None.
        return logits_pad[:N, :vocab_size].reshape(B, T, vocab_size), None

    tgt2d = targets.reshape(-1, 1).astype(jnp.int32)
    if N_pad != N:
        tgt2d = jnp.pad(tgt2d, ((0, N_pad - N), (0, 0)))

    kernel = functools.partial(_train_kernel, v=vocab_size,
                               v_rows_pad=v_rows_pad, v_pad=v_pad,
                               tm=tm, n_rows=N)
    logits_pad, loss = pl.pallas_call(
        kernel,
        out_shape=(
            jax.ShapeDtypeStruct((N_pad, v_pad), jnp.float32),
            jax.ShapeDtypeStruct((1, 1), jnp.float32),
        ),
        grid_spec=pltpu.PrefetchScalarGridSpec(
            num_scalar_prefetch=0,
            grid=(n_tiles,),
            in_specs=[
                pl.BlockSpec((tm, 1), lambda i: (i, 0)),       # token ids
                pl.BlockSpec((tm, 1), lambda i: (i, 0)),       # targets
                table_spec,                                    # embed table
            ],
            out_specs=(
                pl.BlockSpec((tm, v_pad), lambda i: (i, 0)),   # logits
                pl.BlockSpec((1, 1), lambda i: (0, 0)),        # loss accumulator
            ),
        ),
        # Loss is accumulated across row tiles -> reduction axis.
        compiler_params=pltpu.CompilerParams(
            dimension_semantics=("arbitrary",)),
    )(idx2d, tgt2d, table)

    # PyTorch returns the flattened (B*T, V) logits and the scalar loss.
    return logits_pad[:N, :vocab_size], loss[0, 0]


if __name__ == "__main__":
    vocab_size = 65   # e.g. tiny-shakespeare char vocab
    B, T = 2, 8

    key = jax.random.PRNGKey(0)
    k_embed, k_idx, k_tgt = jax.random.split(key, 3)

    # nn.Embedding default init: N(0, 1)
    embed = jax.random.normal(k_embed, (vocab_size, vocab_size), jnp.float32)
    idx = jax.random.randint(k_idx, (B, T), 0, vocab_size, jnp.int32)
    targets = jax.random.randint(k_tgt, (B, T), 0, vocab_size, jnp.int32)

    # Pad/cast the table once ("model init"), not per forward.
    table = prepare_embed_table(embed)
    jax.block_until_ready(table)

    logits, loss = xpt_forward(idx, table, vocab_size, targets)
    jax.block_until_ready((logits, loss))

    # Pure-JAX reference check
    ref_logits = embed[idx].reshape(B * T, vocab_size)
    log_probs = jax.nn.log_softmax(ref_logits, axis=-1)
    ref_loss = -jnp.mean(log_probs[jnp.arange(B * T), targets.reshape(-1)])
    assert logits.shape == (B * T, vocab_size)
    assert jnp.allclose(logits, ref_logits, rtol=1e-4, atol=1e-4)
    assert jnp.allclose(loss, ref_loss, rtol=1e-4, atol=1e-4)

    # targets=None path: shapes + values
    logits_nt, loss_nt = xpt_forward(idx, table, vocab_size, None)
    jax.block_until_ready(logits_nt)
    assert logits_nt.shape == (B, T, vocab_size) and loss_nt is None
    assert jnp.allclose(logits_nt.reshape(B * T, vocab_size), ref_logits,
                        rtol=1e-4, atol=1e-4)

    print("KERNEL_OK")
</pallas_src>

<mosaic_0001>
module attributes {stable_mosaic.version = 11 : i64} {
  func.func @_train_kernel(%arg0: i32, %arg1: memref<16x1xi32, #tpu.memory_space<vmem>>, %arg2: memref<16x1xi32, #tpu.memory_space<vmem>>, %arg3: memref<72x128xf32, #tpu.memory_space<vmem>>, %arg4: memref<16x128xf32, #tpu.memory_space<vmem>>, %arg5: memref<1x1xf32, #tpu.memory_space<vmem>>) attributes {dimension_semantics = [#tpu.dimension_semantics<arbitrary>], iteration_bounds = array<i64: 1>, scalar_prefetch = 0 : i64, scratch_operands = 0 : i64, tpu.core_type = #tpu.core_type<tc>, window_params = [{transform_indices = @transform_0, window_bounds = array<i64: 16, 1>}, {transform_indices = @transform_1, window_bounds = array<i64: 16, 1>}, {pipeline_mode = #tpu.pipeline_mode<synchronous>, transform_indices = @transform_2, window_bounds = array<i64: 72, 128>}, {transform_indices = @transform_3, window_bounds = array<i64: 16, 128>}, {pipeline_mode = #tpu.pipeline_mode<synchronous>, transform_indices = @transform_4, window_bounds = array<i64: 1, 1>}]} {
    %c0_i32 = arith.constant 0 : i32
    %0 = arith.cmpi eq, %arg0, %c0_i32 : i32
    %1 = arith.extui %0 : i1 to i32
    %c0_i32_0 = arith.constant 0 : i32
    %2 = arith.cmpi ne, %1, %c0_i32_0 : i32
    scf.if %2 {
      %cst_22 = arith.constant 0.000000e+00 : f32
      %53 = vector.broadcast %cst_22 : f32 to vector<1x1xf32>
      %c0_23 = arith.constant 0 : index
      %c0_24 = arith.constant 0 : index
      %54 = vector.load %arg5[%c0_23, %c0_24] : memref<1x1xf32, #tpu.memory_space<vmem>>, vector<1x1xf32>
      tpu.vector_store %arg5[%c0_23, %c0_24], %53 {strides = array<i32>} : memref<1x1xf32, #tpu.memory_space<vmem>>, vector<1x1xf32>,
    } else {
    }
    %3 = tpu.iota {dimensions = array<i32: 1>} : vector<16x72xi32>
    %c0 = arith.constant 0 : index
    %c0_1 = arith.constant 0 : index
    %4 = vector.load %arg1[%c0, %c0_1] : memref<16x1xi32, #tpu.memory_space<vmem>>, vector<16x1xi32>
    %5 = vector.broadcast %4 : vector<16x1xi32> to vector<16x72xi32>
    %6 = arith.cmpi eq, %3, %5 : vector<16x72xi32>
    %7 = arith.extui %6 : vector<16x72xi1> to vector<16x72xi32>
    %8 = arith.sitofp %7 : vector<16x72xi32> to vector<16x72xf32>
    %c0_2 = arith.constant 0 : index
    %c0_3 = arith.constant 0 : index
    %9 = vector.load %arg3[%c0_2, %c0_3] : memref<72x128xf32, #tpu.memory_space<vmem>>, vector<72x128xf32>
    %cst = arith.constant dense<0.000000e+00> : vector<16x128xf32>
    %10 = tpu.matmul %8, %9, %cst {dimension_numbers = #tpu.dot_dimension_numbers<[1], [0], [0], [1], [0, 0, 1, 1], [], []>, precision = #tpu.contract_precision<fp32>} : vector<16x72xf32>, vector<72x128xf32>, vector<16x128xf32> -> vector<16x128xf32>
    %c0_4 = arith.constant 0 : index
    %c0_5 = arith.constant 0 : index
    %11 = vector.load %arg4[%c0_4, %c0_5] : memref<16x128xf32, #tpu.memory_space<vmem>>, vector<16x128xf32>
    tpu.vector_store %arg4[%c0_4, %c0_5], %10 {strides = array<i32>} : memref<16x128xf32, #tpu.memory_space<vmem>>, vector<16x128xf32>,
    %12 = tpu.iota {dimensions = array<i32: 1>} : vector<16x128xi32>
    %c65_i32 = arith.constant 65 : i32
    %13 = vector.broadcast %c65_i32 : i32 to vector<16x128xi32>
    %14 = arith.cmpi slt, %12, %13 : vector<16x128xi32>
    %cst_6 = arith.constant -1.000000e+30 : f32
    %15 = vector.broadcast %cst_6 : f32 to vector<16x128xf32>
    %16 = arith.select %14, %10, %15 : vector<16x128xi1>, vector<16x128xf32>
    %cst_7 = arith.constant dense<0xFF800000> : vector<16xf32>
    %17 = vector.multi_reduction <maximumf>, %16, %cst_7 [1] : vector<16x128xf32> to vector<16xf32>
    %18 = vector.shape_cast %17 : vector<16xf32> to vector<16x1xf32>
    %19 = vector.broadcast %18 : vector<16x1xf32> to vector<16x128xf32>
    %20 = arith.subf %16, %19 : vector<16x128xf32>
    %21 = math.exp %20 : vector<16x128xf32>
    %cst_8 = arith.constant dense<0.000000e+00> : vector<16xf32>
    %22 = vector.multi_reduction <add>, %21, %cst_8 [1] : vector<16x128xf32> to vector<16xf32>
    %23 = vector.shape_cast %22 : vector<16xf32> to vector<16x1xf32>
    %24 = math.log %23 : vector<16x1xf32>
    %25 = arith.addf %18, %24 : vector<16x1xf32>
    %c0_9 = arith.constant 0 : index
    %c0_10 = arith.constant 0 : index
    %26 = vector.load %arg2[%c0_9, %c0_10] : memref<16x1xi32, #tpu.memory_space<vmem>>, vector<16x1xi32>
    %27 = vector.broadcast %26 : vector<16x1xi32> to vector<16x128xi32>
    %28 = arith.cmpi eq, %12, %27 : vector<16x128xi32>
    %cst_11 = arith.constant 0.000000e+00 : f32
    %29 = vector.broadcast %cst_11 : f32 to vector<16x128xf32>
    %30 = arith.select %28, %10, %29 : vector<16x128xi1>, vector<16x128xf32>
    %cst_12 = arith.constant dense<0.000000e+00> : vector<16xf32>
    %31 = vector.multi_reduction <add>, %30, %cst_12 [1] : vector<16x128xf32> to vector<16xf32>
    %32 = vector.shape_cast %31 : vector<16xf32> to vector<16x1xf32>
    %33 = arith.subf %25, %32 : vector<16x1xf32>
    %c16_i32 = arith.constant 16 : i32
    %34 = arith.muli %arg0, %c16_i32 : i32
    %35 = tpu.iota {dimensions = array<i32: 0>} : vector<16x1xi32>
    %36 = vector.broadcast %34 : i32 to vector<16x1xi32>
    %37 = arith.addi %36, %35 : vector<16x1xi32>
    %c16_i32_13 = arith.constant 16 : i32
    %38 = vector.broadcast %c16_i32_13 : i32 to vector<16x1xi32>
    %39 = arith.cmpi slt, %37, %38 : vector<16x1xi32>
    %cst_14 = arith.constant 0.000000e+00 : f32
    %40 = vector.broadcast %cst_14 : f32 to vector<16x1xf32>
    %41 = arith.select %39, %33, %40 : vector<16x1xi1>, vector<16x1xf32>
    %c0_15 = arith.constant 0 : index
    %c0_16 = arith.constant 0 : index
    %42 = vector.load %arg5[%c0_15, %c0_16] : memref<1x1xf32, #tpu.memory_space<vmem>>, vector<1x1xf32>
    %43 = vector.shape_cast %41 : vector<16x1xf32> to vector<1x16x1xf32>
    %cst_17 = arith.constant dense<0.000000e+00> : vector<1xf32>
    %44 = vector.multi_reduction <add>, %43, %cst_17 [1, 2] : vector<1x16x1xf32> to vector<1xf32>
    %45 = vector.shape_cast %44 : vector<1xf32> to vector<1x1x1xf32>
    %46 = vector.extract %45[0, 0, 0] : f32 from vector<1x1x1xf32>
    %47 = vector.broadcast %46 : f32 to vector<1x1xf32>
    %48 = arith.addf %42, %47 : vector<1x1xf32>
    %c0_18 = arith.constant 0 : index
    %c0_19 = arith.constant 0 : index
    %49 = vector.load %arg5[%c0_18, %c0_19] : memref<1x1xf32, #tpu.memory_space<vmem>>, vector<1x1xf32>
    tpu.vector_store %arg5[%c0_18, %c0_19], %48 {strides = array<i32>} : memref<1x1xf32, #tpu.memory_space<vmem>>, vector<1x1xf32>,
    %c0_i32_20 = arith.constant 0 : i32
    %50 = arith.cmpi eq, %arg0, %c0_i32_20 : i32
    %51 = arith.extui %50 : i1 to i32
    %c0_i32_21 = arith.constant 0 : i32
    %52 = arith.cmpi ne, %51, %c0_i32_21 : i32
    scf.if %52 {
      %c0_22 = arith.constant 0 : index
      %c0_23 = arith.constant 0 : index
      %53 = vector.load %arg5[%c0_22, %c0_23] : memref<1x1xf32, #tpu.memory_space<vmem>>, vector<1x1xf32>
      %cst_24 = arith.constant 6.250000e-02 : f32
      %54 = vector.broadcast %cst_24 : f32 to vector<1x1xf32>
      %55 = arith.mulf %53, %54 : vector<1x1xf32>
      %c0_25 = arith.constant 0 : index
      %c0_26 = arith.constant 0 : index
      %56 = vector.load %arg5[%c0_25, %c0_26] : memref<1x1xf32, #tpu.memory_space<vmem>>, vector<1x1xf32>
      tpu.vector_store %arg5[%c0_25, %c0_26], %55 {strides = array<i32>} : memref<1x1xf32, #tpu.memory_space<vmem>>, vector<1x1xf32>,
    } else {
    }
    return
  }
  func.func @transform_0(%arg0: i32) -> (i32, i32) {
    %c0_i32 = arith.constant 0 : i32
    %c0_i32_0 = arith.constant 0 : i32
    return %arg0, %c0_i32 : i32, i32
  }
  func.func @transform_1(%arg0: i32) -> (i32, i32) {
    %c0_i32 = arith.constant 0 : i32
    %c0_i32_0 = arith.constant 0 : i32
    return %arg0, %c0_i32 : i32, i32
  }
  func.func @transform_2(%arg0: i32) -> (i32, i32) {
    %c0_i32 = arith.constant 0 : i32
    %c0_i32_0 = arith.constant 0 : i32
    %c0_i32_1 = arith.constant 0 : i32
    return %c0_i32, %c0_i32_0 : i32, i32
  }
  func.func @transform_3(%arg0: i32) -> (i32, i32) {
    %c0_i32 = arith.constant 0 : i32
    %c0_i32_0 = arith.constant 0 : i32
    return %arg0, %c0_i32 : i32, i32
  }
  func.func @transform_4(%arg0: i32) -> (i32, i32) {
    %c0_i32 = arith.constant 0 : i32
    %c0_i32_0 = arith.constant 0 : i32
    %c0_i32_1 = arith.constant 0 : i32
    return %c0_i32, %c0_i32_0 : i32, i32
  }
}

</mosaic_0001>

<llo_original>
// kernel: tpu_custom_call.1
$region0: #{tpu_custom_call.1}
  #allocation0 [shape = 'u32[]', space=smem, size = 0x4, offset = 0x4, fixed_abs, tag = 'smem constant byte address 0x4 - core index']
  #allocation1 [shape = 'u32[144,128]{1,0:T(1,128)}', space=vmem, size = 0x12000, scoped, tag = 'internal scratch']
  %s0 = inlined_call_operand.vmem [shape: s32[16,1], index: 0, kind: input, shape index: {}]
  %s1 = inlined_call_operand.vmem [shape: s32[16,1], index: 1, kind: input, shape index: {}]
  %s2 = inlined_call_operand.hbm [shape: f32[72,128], index: 2, kind: input, shape index: {}]
  %s3 = inlined_call_operand.hbm [shape: f32[16,128], index: 3, kind: output, shape index: {0}]
  %s4 = inlined_call_operand.hbm [shape: f32[1,1], index: 4, kind: output, shape index: {1}]
  %5 = xla_tuple %s3, %s4
  %s6 = sld [smem:[#allocation0]]
  $region42: #{tpu_custom_call.1} parent=0
    _
  %s8 = ssub.s32 1, %s6
  %s9 = scalar_select 0, %s8, %s6
  $region1: #{tpu_custom_call.1} parent=0
    #allocation2 [shape = 'u8[36864]{0}', space=vmem, size = 0x9000, scoped, tag = 'input window, operand 2, single buffered']
    #allocation3 [shape = 's32[1]{0}', space=sflag, size = 0x4, scoped, tag = 'scoped memory for tpu_custom_call.1']
    #allocation4 [shape = 's32[1]{0}', space=sflag, size = 0x4, scoped, tag = 'scoped memory for tpu_custom_call.1']
    #allocation5 [shape = 'u8[8192]{0}', space=vmem, size = 0x2000, scoped, tag = 'output window, operand 0, single buffered']
    #allocation6 [shape = 'u8[512]{0}', space=vmem, size = 0x400, scoped, tag = 'output window, operand 1, single buffered']
    #allocation7 [shape = 's32[1]{0}', space=sflag, size = 0x4, scoped, tag = 'scoped memory for tpu_custom_call.1']
    %10 = vsyncpa [#allocation3], 0
    %11 = vsyncpa [#allocation4], 0
    %12 = vsyncpa [#allocation7], 0
    // Predicated region
    $region2: #{tpu_custom_call.1} parent=1 // pred_check
      _
    $region3: #{tpu_custom_call.1} parent=1 // pred_check_branch
      %14 = sbr.rel (0) target = $region5
    $region4: #{tpu_custom_call.1} parent=1 // pred_region
      _
    $region5: #{tpu_custom_call.1} parent=1 // pred_fallthru
      _
    // Predicated region
    $region6: #{tpu_custom_call.1} parent=1 // pred_check
      _
    $region7: #{tpu_custom_call.1} parent=1 // pred_check_branch
      %16 = sbr.rel (0) target = $region9
    $region8: #{tpu_custom_call.1} parent=1 // pred_region
      _
    $region9: #{tpu_custom_call.1} parent=1 // pred_fallthru
      _
    // Predicated region
    $region10: #{tpu_custom_call.1} parent=1 // pred_check
      _
    $region11: #{tpu_custom_call.1} parent=1 // pred_check_branch
      %18 = sbr.rel (0) target = $region13
    $region12: #{tpu_custom_call.1} parent=1 // pred_region
      %s20 = ssub.s32 1152, 1152
      %21 = vsyncadd [#allocation3], %s20
      %s22 = sshll.u32 [#allocation2], 4
      %s23 = int_to_ptr.vmem [resolvable:$true] %s22
      %28 = dma.hbm_to_vmem [thread:$0]  %s2, 1152, %s23, [#allocation3], 128, 128, 8
    $region13: #{tpu_custom_call.1} parent=1 // pred_fallthru
      _
    // Predicated region
    $region14: #{tpu_custom_call.1} parent=1 // pred_check
      _
    $region15: #{tpu_custom_call.1} parent=1 // pred_check_branch
      %30 = sbr.rel (0) target = $region17
    $region16: #{tpu_custom_call.1} parent=1 // pred_region
      %31 = dma.done [#allocation3], 1152
    $region17: #{tpu_custom_call.1} parent=1 // pred_fallthru
      _
    %p32 = scmp.eq.s32.totalorder 0, 0
    // Predicated region
    $region18: #{tpu_custom_call.1} parent=1 // pred_check
      %p33 = pneg %p32
    $region19: #{tpu_custom_call.1} parent=1 // pred_check_branch
      %35 = sbr.rel (%p33) target = $region21
    $region20: #{tpu_custom_call.1} parent=1 // pred_region
      %vm36 = vcmask 0
      %37 = vst.msk [vmem:[#allocation6] sm:$0x1] %vm36, 0.0
    $region21: #{tpu_custom_call.1} parent=1 // pred_fallthru
      _
    %v38 = vlaneseq
    %v39 = vand.u32 %v38, 127
    %v40 = vld [vmem:[%s0] sm:$0xff]
    %v41 = vld [vmem:[%s0 + $0x8] sm:$0xff]
    %42 = vset.pattern.permute.xlu0 0
    %43 = vperm.xlu0 %42, %v40
    %v44 = vpop.permute.xlu0 %43
    %45 = vset.pattern.permute.xlu0 0
    %46 = vperm.xlu0 %45, %v41
    %v47 = vpop.permute.xlu0 %46
    %vm48 = vcmp.eq.s32.totalorder %v39, %v44
    %vm49 = vcmp.eq.s32.totalorder %v39, %v47
    %v50 = vsel %vm48, 1, 0
    %v51 = vsel %vm49, 1, 0
    %v52 = vcvt.s32.f32 %v50
    %v53 = vcvt.s32.f32 %v51
    %v54 = vld [vmem:[#allocation2] sm:$0xff]
    %v55 = vld [vmem:[#allocation2 + $0x8] sm:$0xff]
    %v56 = vld [vmem:[#allocation2 + $0x10] sm:$0xff]
    %v57 = vld [vmem:[#allocation2 + $0x18] sm:$0xff]
    %v58 = vld [vmem:[#allocation2 + $0x20] sm:$0xff]
    %v59 = vld [vmem:[#allocation2 + $0x28] sm:$0xff]
    %v60 = vld [vmem:[#allocation2 + $0x30] sm:$0xff]
    %v61 = vld [vmem:[#allocation2 + $0x38] sm:$0xff]
    %v62 = vld [vmem:[#allocation2 + $0x40] sm:$0xff]
    %vm63 = vcmask 588800
    %v65 = vsel %vm63, %v52, 0
    %v68 = vsel %vm63, %v53, 0
    %70 = vmatprep.subr.mxu0 0.0
    %v71 = vand.u32 %v54, 4294901760
    %72 = vmatpush1.msra.mxu0 %v71
    %73 = vmatprep.subr.mxu0 0.0
    %v74 = vand.u32 %v55, 4294901760
    %75 = vmatpush1.msra.mxu0 %v74
    %76 = vmatprep.subr.mxu0 0.0
    %v77 = vand.u32 %v56, 4294901760
    %78 = vmatpush1.msra.mxu0 %v77
    %79 = vmatprep.subr.mxu0 0.0
    %v80 = vand.u32 %v57, 4294901760
    %81 = vmatpush1.msra.mxu0 %v80
    %82 = vmatprep.subr.mxu0 0.0
    %v83 = vand.u32 %v58, 4294901760
    %84 = vmatpush1.msra.mxu0 %v83
    %85 = vmatprep.subr.mxu0 0.0
    %v86 = vand.u32 %v59, 4294901760
    %87 = vmatpush1.msra.mxu0 %v86
    %88 = vmatprep.subr.mxu0 0.0
    %v89 = vand.u32 %v60, 4294901760
    %90 = vmatpush1.msra.mxu0 %v89
    %91 = vmatprep.subr.mxu0 0.0
    %v92 = vand.u32 %v61, 4294901760
    %93 = vmatpush1.msra.mxu0 %v92
    %94 = vmatprep.subr.mxu0 0.0
    %v95 = vand.u32 %v62, 4294901760
    %96 = vmatpush1.msra.mxu0 %v95
    %97 = vmatprep.subr.mxu0 0.0
    %98 = vmatpush1.msra.mxu0 0.0
    %99 = vmatprep.subr.mxu0 0.0
    %100 = vmatpush1.msra.mxu0 0.0
    %101 = vmatprep.subr.mxu0 0.0
    %102 = vmatpush1.msra.mxu0 0.0
    %103 = vmatprep.subr.mxu0 0.0
    %104 = vmatpush1.msra.mxu0 0.0
    %105 = vmatprep.subr.mxu0 0.0
    %106 = vmatpush1.msra.mxu0 0.0
    %107 = vmatprep.subr.mxu0 0.0
    %108 = vmatpush1.msra.mxu0 0.0
    %109 = vmatprep.subr.mxu0 0.0
    %110 = vmatpush1.msra.mxu0 0.0
    %111 = vmatprep.subr.mxu0 0.0
    %112 = vmatpush1.msra.mxu0 0.0
    %113 = vmatprep.subr.mxu0 0.0
    %114 = vmatpush1.msra.mxu0 0.0
    %115 = vmatprep.subr.mxu0 0.0
    %116 = vmatpush1.msra.mxu0 0.0
    %117 = vmatprep.subr.mxu0 0.0
    %118 = vmatpush1.msra.mxu0 0.0
    %119 = vmatprep.subr.mxu0 0.0
    %120 = vmatpush1.msra.mxu0 0.0
    %121 = vmatprep.subr.mxu0 0.0
    %122 = vmatpush1.msra.mxu0 0.0
    %123 = vmatprep.subr.mxu0 0.0
    %124 = vmatpush1.msra.mxu0 0.0
    %125 = vmatprep.subr.mxu0 0.0
    %126 = vmatpush1.msra.mxu0 0.0
    %127 = vmatprep.subr.mxu0 0.0
    %128 = vmatpush1.msra.mxu0 0.0
    %129 = vmatprep.subr.mxu0 0.0
    %130 = vmatpush1.msra.mxu0 0.0
    %131 = vmatprep.subr.mxu0 0.0
    %132 = vmatpush1.msra.mxu0 0.0
    %133 = vmatprep.subr.mxu0 0.0
    %134 = vmatpush1.msra.mxu0 0.0
    %135 = vmatprep.subr.mxu0 0.0
    %136 = vmatpush1.msra.mxu0 0.0
    %137 = vmatprep.subr.mxu0 0.0
    %138 = vmatpush1.msra.mxu0 0.0
    %139 = vmatprep.subr.mxu0 0.0
    %140 = vmatpush1.msra.mxu0 0.0
    %141 = vmatprep.subr.mxu0 0.0
    %142 = vmatpush1.msra.mxu0 0.0
    %143 = vmatprep.mubr.f32.mxu0 0.0
    %v144 = vand.u32 %v65, 4294901760
    %v145 = vsub.f32 %v65, %v144
    %v146 = vand.u32 %v145, 4294901760
    %v147 = vsub.f32 %v145, %v146
    %v148 = vand.u32 %v147, 4294901760
    %149 = vmatmul.mubr.f32.gmra.mrb[0].mxu0 %v148
    %v150 = vpop.f32.mrb[0].mxu0
    %v151 = vadd.f32 0.0, %v150
    %v152 = vpop.f32.mrb[0].mxu0
    %153 = vmatprep.mubr.f32.mxu0 0.0
    %v154 = vand.u32 %v68, 4294901760
    %v155 = vsub.f32 %v68, %v154
    %v156 = vand.u32 %v155, 4294901760
    %v157 = vsub.f32 %v155, %v156
    %v158 = vand.u32 %v157, 4294901760
    %159 = vmatmul.mubr.f32.gmra.mrb[0].mxu0 %v158
    %v160 = vpop.f32.mrb[0].mxu0
    %v161 = vadd.f32 0.0, %v160
    %v162 = vpop.f32.mrb[0].mxu0
    %163 = vdwg.mxu0
    %164 = vmatprep.subr.mxu0 0.0
    %v165 = vand.u32 %v54, 4294901760
    %v166 = vsub.f32 %v54, %v165
    %v167 = vand.u32 %v166, 4294901760
    %v168 = vsub.f32 %v166, %v167
    %v169 = vand.u32 %v168, 4294901760
    %170 = vmatpush1.msra.mxu0 %v169
    %171 = vmatprep.subr.mxu0 0.0
    %v172 = vand.u32 %v55, 4294901760
    %v173 = vsub.f32 %v55, %v172
    %v174 = vand.u32 %v173, 4294901760
    %v175 = vsub.f32 %v173, %v174
    %v176 = vand.u32 %v175, 4294901760
    %177 = vmatpush1.msra.mxu0 %v176
    %178 = vmatprep.subr.mxu0 0.0
    %v179 = vand.u32 %v56, 4294901760
    %v180 = vsub.f32 %v56, %v179
    %v181 = vand.u32 %v180, 4294901760
    %v182 = vsub.f32 %v180, %v181
    %v183 = vand.u32 %v182, 4294901760
    %184 = vmatpush1.msra.mxu0 %v183
    %185 = vmatprep.subr.mxu0 0.0
    %v186 = vand.u32 %v57, 4294901760
    %v187 = vsub.f32 %v57, %v186
    %v188 = vand.u32 %v187, 4294901760
    %v189 = vsub.f32 %v187, %v188
    %v190 = vand.u32 %v189, 4294901760
    %191 = vmatpush1.msra.mxu0 %v190
    %192 = vmatprep.subr.mxu0 0.0
    %v193 = vand.u32 %v58, 4294901760
    %v194 = vsub.f32 %v58, %v193
    %v195 = vand.u32 %v194, 4294901760
    %v196 = vsub.f32 %v194, %v195
    %v197 = vand.u32 %v196, 4294901760
    %198 = vmatpush1.msra.mxu0 %v197
    %199 = vmatprep.subr.mxu0 0.0
    %v200 = vand.u32 %v59, 4294901760
    %v201 = vsub.f32 %v59, %v200
    %v202 = vand.u32 %v201, 4294901760
    %v203 = vsub.f32 %v201, %v202
    %v204 = vand.u32 %v203, 4294901760
    %205 = vmatpush1.msra.mxu0 %v204
    %206 = vmatprep.subr.mxu0 0.0
    %v207 = vand.u32 %v60, 4294901760
    %v208 = vsub.f32 %v60, %v207
    %v209 = vand.u32 %v208, 4294901760
    %v210 = vsub.f32 %v208, %v209
    %v211 = vand.u32 %v210, 4294901760
    %212 = vmatpush1.msra.mxu0 %v211
    %213 = vmatprep.subr.mxu0 0.0
    %v214 = vand.u32 %v61, 4294901760
    %v215 = vsub.f32 %v61, %v214
    %v216 = vand.u32 %v215, 4294901760
    %v217 = vsub.f32 %v215, %v216
    %v218 = vand.u32 %v217, 4294901760
    %219 = vmatpush1.msra.mxu0 %v218
    %220 = vmatprep.subr.mxu0 0.0
    %v221 = vand.u32 %v62, 4294901760
    %v222 = vsub.f32 %v62, %v221
    %v223 = vand.u32 %v222, 4294901760
    %v224 = vsub.f32 %v222, %v223
    %v225 = vand.u32 %v224, 4294901760
    %226 = vmatpush1.msra.mxu0 %v225
    %227 = vmatprep.subr.mxu0 0.0
    %228 = vmatpush1.msra.mxu0 0.0
    %229 = vmatprep.subr.mxu0 0.0
    %230 = vmatpush1.msra.mxu0 0.0
    %231 = vmatprep.subr.mxu0 0.0
    %232 = vmatpush1.msra.mxu0 0.0
    %233 = vmatprep.subr.mxu0 0.0
    %234 = vmatpush1.msra.mxu0 0.0
    %235 = vmatprep.subr.mxu0 0.0
    %236 = vmatpush1.msra.mxu0 0.0
    %237 = vmatprep.subr.mxu0 0.0
    %238 = vmatpush1.msra.mxu0 0.0
    %239 = vmatprep.subr.mxu0 0.0
    %240 = vmatpush1.msra.mxu0 0.0
    %241 = vmatprep.subr.mxu0 0.0
    %242 = vmatpush1.msra.mxu0 0.0
    %243 = vmatprep.subr.mxu0 0.0
    %244 = vmatpush1.msra.mxu0 0.0
    %245 = vmatprep.subr.mxu0 0.0
    %246 = vmatpush1.msra.mxu0 0.0
    %247 = vmatprep.subr.mxu0 0.0
    %248 = vmatpush1.msra.mxu0 0.0
    %249 = vmatprep.subr.mxu0 0.0
    %250 = vmatpush1.msra.mxu0 0.0
    %251 = vmatprep.subr.mxu0 0.0
    %252 = vmatpush1.msra.mxu0 0.0
    %253 = vmatprep.subr.mxu0 0.0
    %254 = vmatpush1.msra.mxu0 0.0
    %255 = vmatprep.subr.mxu0 0.0
    %256 = vmatpush1.msra.mxu0 0.0
    %257 = vmatprep.subr.mxu0 0.0
    %258 = vmatpush1.msra.mxu0 0.0
    %259 = vmatprep.subr.mxu0 0.0
    %260 = vmatpush1.msra.mxu0 0.0
    %261 = vmatprep.subr.mxu0 0.0
    %262 = vmatpush1.msra.mxu0 0.0
    %263 = vmatprep.subr.mxu0 0.0
    %264 = vmatpush1.msra.mxu0 0.0
    %265 = vmatprep.subr.mxu0 0.0
    %266 = vmatpush1.msra.mxu0 0.0
    %267 = vmatprep.subr.mxu0 0.0
    %268 = vmatpush1.msra.mxu0 0.0
    %269 = vmatprep.subr.mxu0 0.0
    %270 = vmatpush1.msra.mxu0 0.0
    %271 = vmatprep.subr.mxu0 0.0
    %272 = vmatpush1.msra.mxu0 0.0
    %273 = vmatprep.mubr.f32.mxu0 0.0
    %v274 = vand.u32 %v65, 4294901760
    %275 = vmatmul.mubr.f32.gmra.mrb[0].mxu0 %v274
    %v276 = vpop.f32.mrb[0].mxu0
    %v277 = vadd.f32 %v151, %v276
    %v278 = vpop.f32.mrb[0].mxu0
    %279 = vmatprep.mubr.f32.mxu0 0.0
    %v280 = vand.u32 %v68, 4294901760
    %281 = vmatmul.mubr.f32.gmra.mrb[0].mxu0 %v280
    %v282 = vpop.f32.mrb[0].mxu0
    %v283 = vadd.f32 %v161, %v282
    %v284 = vpop.f32.mrb[0].mxu0
    %285 = vdwg.mxu0
    %286 = vmatprep.subr.mxu0 0.0
    %v287 = vand.u32 %v54, 4294901760
    %v288 = vsub.f32 %v54, %v287
    %289 = vmatpush1.msra.mxu0 %v288
    %290 = vmatprep.subr.mxu0 0.0
    %v291 = vand.u32 %v55, 4294901760
    %v292 = vsub.f32 %v55, %v291
    %293 = vmatpush1.msra.mxu0 %v292
    %294 = vmatprep.subr.mxu0 0.0
    %v295 = vand.u32 %v56, 4294901760
    %v296 = vsub.f32 %v56, %v295
    %297 = vmatpush1.msra.mxu0 %v296
    %298 = vmatprep.subr.mxu0 0.0
    %v299 = vand.u32 %v57, 4294901760
    %v300 = vsub.f32 %v57, %v299
    %301 = vmatpush1.msra.mxu0 %v300
    %302 = vmatprep.subr.mxu0 0.0
    %v303 = vand.u32 %v58, 4294901760
    %v304 = vsub.f32 %v58, %v303
    %305 = vmatpush1.msra.mxu0 %v304
    %306 = vmatprep.subr.mxu0 0.0
    %v307 = vand.u32 %v59, 4294901760
    %v308 = vsub.f32 %v59, %v307
    %309 = vmatpush1.msra.mxu0 %v308
    %310 = vmatprep.subr.mxu0 0.0
    %v311 = vand.u32 %v60, 4294901760
    %v312 = vsub.f32 %v60, %v311
    %313 = vmatpush1.msra.mxu0 %v312
    %314 = vmatprep.subr.mxu0 0.0
    %v315 = vand.u32 %v61, 4294901760
    %v316 = vsub.f32 %v61, %v315
    %317 = vmatpush1.msra.mxu0 %v316
    %318 = vmatprep.subr.mxu0 0.0
    %v319 = vand.u32 %v62, 4294901760
    %v320 = vsub.f32 %v62, %v319
    %321 = vmatpush1.msra.mxu0 %v320
    %322 = vmatprep.subr.mxu0 0.0
    %323 = vmatpush1.msra.mxu0 0.0
    %324 = vmatprep.subr.mxu0 0.0
    %325 = vmatpush1.msra.mxu0 0.0
    %326 = vmatprep.subr.mxu0 0.0
    %327 = vmatpush1.msra.mxu0 0.0
    %328 = vmatprep.subr.mxu0 0.0
    %329 = vmatpush1.msra.mxu0 0.0
    %330 = vmatprep.subr.mxu0 0.0
    %331 = vmatpush1.msra.mxu0 0.0
    %332 = vmatprep.subr.mxu0 0.0
    %333 = vmatpush1.msra.mxu0 0.0
    %334 = vmatprep.subr.mxu0 0.0
    %335 = vmatpush1.msra.mxu0 0.0
    %336 = vmatprep.subr.mxu0 0.0
    %337 = vmatpush1.msra.mxu0 0.0
    %338 = vmatprep.subr.mxu0 0.0
    %339 = vmatpush1.msra.mxu0 0.0
    %340 = vmatprep.subr.mxu0 0.0
    %341 = vmatpush1.msra.mxu0 0.0
    %342 = vmatprep.subr.mxu0 0.0
    %343 = vmatpush1.msra.mxu0 0.0
    %344 = vmatprep.subr.mxu0 0.0
    %345 = vmatpush1.msra.mxu0 0.0
    %346 = vmatprep.subr.mxu0 0.0
    %347 = vmatpush1.msra.mxu0 0.0
    %348 = vmatprep.subr.mxu0 0.0
    %349 = vmatpush1.msra.mxu0 0.0
    %350 = vmatprep.subr.mxu0 0.0
    %351 = vmatpush1.msra.mxu0 0.0
    %352 = vmatprep.subr.mxu0 0.0
    %353 = vmatpush1.msra.mxu0 0.0
    %354 = vmatprep.subr.mxu0 0.0
    %355 = vmatpush1.msra.mxu0 0.0
    %356 = vmatprep.subr.mxu0 0.0
    %357 = vmatpush1.msra.mxu0 0.0
    %358 = vmatprep.subr.mxu0 0.0
    %359 = vmatpush1.msra.mxu0 0.0
    %360 = vmatprep.subr.mxu0 0.0
    %361 = vmatpush1.msra.mxu0 0.0
    %362 = vmatprep.subr.mxu0 0.0
    %363 = vmatpush1.msra.mxu0 0.0
    %364 = vmatprep.subr.mxu0 0.0
    %365 = vmatpush1.msra.mxu0 0.0
    %366 = vmatprep.subr.mxu0 0.0
    %367 = vmatpush1.msra.mxu0 0.0
    %368 = vmatprep.mubr.f32.mxu0 0.0
    %v369 = vand.u32 %v65, 4294901760
    %v370 = vsub.f32 %v65, %v369
    %371 = vmatmul.mubr.f32.gmra.mrb[0].mxu0 %v370
    %v372 = vpop.f32.mrb[0].mxu0
    %v373 = vadd.f32 %v277, %v372
    %v374 = vpop.f32.mrb[0].mxu0
    %375 = vmatprep.mubr.f32.mxu0 0.0
    %v376 = vand.u32 %v68, 4294901760
    %v377 = vsub.f32 %v68, %v376
    %378 = vmatmul.mubr.f32.gmra.mrb[0].mxu0 %v377
    %v379 = vpop.f32.mrb[0].mxu0
    %v380 = vadd.f32 %v283, %v379
    %v381 = vpop.f32.mrb[0].mxu0
    %382 = vdwg.mxu0
    %383 = vmatprep.subr.mxu0 0.0
    %v384 = vand.u32 %v54, 4294901760
    %385 = vmatpush1.msra.mxu0 %v384
    %386 = vmatprep.subr.mxu0 0.0
    %v387 = vand.u32 %v55, 4294901760
    %388 = vmatpush1.msra.mxu0 %v387
    %389 = vmatprep.subr.mxu0 0.0
    %v390 = vand.u32 %v56, 4294901760
    %391 = vmatpush1.msra.mxu0 %v390
    %392 = vmatprep.subr.mxu0 0.0
    %v393 = vand.u32 %v57, 4294901760
    %394 = vmatpush1.msra.mxu0 %v393
    %395 = vmatprep.subr.mxu0 0.0
    %v396 = vand.u32 %v58, 4294901760
    %397 = vmatpush1.msra.mxu0 %v396
    %398 = vmatprep.subr.mxu0 0.0
    %v399 = vand.u32 %v59, 4294901760
    %400 = vmatpush1.msra.mxu0 %v399
    %401 = vmatprep.subr.mxu0 0.0
    %v402 = vand.u32 %v60, 4294901760
    %403 = vmatpush1.msra.mxu0 %v402
    %404 = vmatprep.subr.mxu0 0.0
    %v405 = vand.u32 %v61, 4294901760
    %406 = vmatpush1.msra.mxu0 %v405
    %407 = vmatprep.subr.mxu0 0.0
    %v408 = vand.u32 %v62, 4294901760
    %409 = vmatpush1.msra.mxu0 %v408
    %410 = vmatprep.subr.mxu0 0.0
    %411 = vmatpush1.msra.mxu0 0.0
    %412 = vmatprep.subr.mxu0 0.0
    %413 = vmatpush1.msra.mxu0 0.0
    %414 = vmatprep.subr.mxu0 0.0
    %415 = vmatpush1.msra.mxu0 0.0
    %416 = vmatprep.subr.mxu0 0.0
    %417 = vmatpush1.msra.mxu0 0.0
    %418 = vmatprep.subr.mxu0 0.0
    %419 = vmatpush1.msra.mxu0 0.0
    %420 = vmatprep.subr.mxu0 0.0
    %421 = vmatpush1.msra.mxu0 0.0
    %422 = vmatprep.subr.mxu0 0.0
    %423 = vmatpush1.msra.mxu0 0.0
    %424 = vmatprep.subr.mxu0 0.0
    %425 = vmatpush1.msra.mxu0 0.0
    %426 = vmatprep.subr.mxu0 0.0
    %427 = vmatpush1.msra.mxu0 0.0
    %428 = vmatprep.subr.mxu0 0.0
    %429 = vmatpush1.msra.mxu0 0.0
    %430 = vmatprep.subr.mxu0 0.0
    %431 = vmatpush1.msra.mxu0 0.0
    %432 = vmatprep.subr.mxu0 0.0
    %433 = vmatpush1.msra.mxu0 0.0
    %434 = vmatprep.subr.mxu0 0.0
    %435 = vmatpush1.msra.mxu0 0.0
    %436 = vmatprep.subr.mxu0 0.0
    %437 = vmatpush1.msra.mxu0 0.0
    %438 = vmatprep.subr.mxu0 0.0
    %439 = vmatpush1.msra.mxu0 0.0
    %440 = vmatprep.subr.mxu0 0.0
    %441 = vmatpush1.msra.mxu0 0.0
    %442 = vmatprep.subr.mxu0 0.0
    %443 = vmatpush1.msra.mxu0 0.0
    %444 = vmatprep.subr.mxu0 0.0
    %445 = vmatpush1.msra.mxu0 0.0
    %446 = vmatprep.subr.mxu0 0.0
    %447 = vmatpush1.msra.mxu0 0.0
    %448 = vmatprep.subr.mxu0 0.0
    %449 = vmatpush1.msra.mxu0 0.0
    %450 = vmatprep.subr.mxu0 0.0
    %451 = vmatpush1.msra.mxu0 0.0
    %452 = vmatprep.subr.mxu0 0.0
    %453 = vmatpush1.msra.mxu0 0.0
    %454 = vmatprep.subr.mxu0 0.0
    %455 = vmatpush1.msra.mxu0 0.0
    %456 = vmatprep.mubr.f32.mxu0 0.0
    %v457 = vand.u32 %v65, 4294901760
    %v458 = vsub.f32 %v65, %v457
    %v459 = vand.u32 %v458, 4294901760
    %460 = vmatmul.mubr.f32.gmra.mrb[0].mxu0 %v459
    %v461 = vpop.f32.mrb[0].mxu0
    %v462 = vadd.f32 %v373, %v461
    %v463 = vpop.f32.mrb[0].mxu0
    %464 = vmatprep.mubr.f32.mxu0 0.0
    %v465 = vand.u32 %v68, 4294901760
    %v466 = vsub.f32 %v68, %v465
    %v467 = vand.u32 %v466, 4294901760
    %468 = vmatmul.mubr.f32.gmra.mrb[0].mxu0 %v467
    %v469 = vpop.f32.mrb[0].mxu0
    %v470 = vadd.f32 %v380, %v469
    %v471 = vpop.f32.mrb[0].mxu0
    %472 = vdwg.mxu0
    %473 = vmatprep.subr.mxu0 0.0
    %v474 = vand.u32 %v54, 4294901760
    %v475 = vsub.f32 %v54, %v474
    %v476 = vand.u32 %v475, 4294901760
    %477 = vmatpush1.msra.mxu0 %v476
    %478 = vmatprep.subr.mxu0 0.0
    %v479 = vand.u32 %v55, 4294901760
    %v480 = vsub.f32 %v55, %v479
    %v481 = vand.u32 %v480, 4294901760
    %482 = vmatpush1.msra.mxu0 %v481
    %483 = vmatprep.subr.mxu0 0.0
    %v484 = vand.u32 %v56, 4294901760
    %v485 = vsub.f32 %v56, %v484
    %v486 = vand.u32 %v485, 4294901760
    %487 = vmatpush1.msra.mxu0 %v486
    %488 = vmatprep.subr.mxu0 0.0
    %v489 = vand.u32 %v57, 4294901760
    %v490 = vsub.f32 %v57, %v489
    %v491 = vand.u32 %v490, 4294901760
    %492 = vmatpush1.msra.mxu0 %v491
    %493 = vmatprep.subr.mxu0 0.0
    %v494 = vand.u32 %v58, 4294901760
    %v495 = vsub.f32 %v58, %v494
    %v496 = vand.u32 %v495, 4294901760
    %497 = vmatpush1.msra.mxu0 %v496
    %498 = vmatprep.subr.mxu0 0.0
    %v499 = vand.u32 %v59, 4294901760
    %v500 = vsub.f32 %v59, %v499
    %v501 = vand.u32 %v500, 4294901760
    %502 = vmatpush1.msra.mxu0 %v501
    %503 = vmatprep.subr.mxu0 0.0
    %v504 = vand.u32 %v60, 4294901760
    %v505 = vsub.f32 %v60, %v504
    %v506 = vand.u32 %v505, 4294901760
    %507 = vmatpush1.msra.mxu0 %v506
    %508 = vmatprep.subr.mxu0 0.0
    %v509 = vand.u32 %v61, 4294901760
    %v510 = vsub.f32 %v61, %v509
    %v511 = vand.u32 %v510, 4294901760
    %512 = vmatpush1.msra.mxu0 %v511
    %513 = vmatprep.subr.mxu0 0.0
    %v514 = vand.u32 %v62, 4294901760
    %v515 = vsub.f32 %v62, %v514
    %v516 = vand.u32 %v515, 4294901760
    %517 = vmatpush1.msra.mxu0 %v516
    %518 = vmatprep.subr.mxu0 0.0
    %519 = vmatpush1.msra.mxu0 0.0
    %520 = vmatprep.subr.mxu0 0.0
    %521 = vmatpush1.msra.mxu0 0.0
    %522 = vmatprep.subr.mxu0 0.0
    %523 = vmatpush1.msra.mxu0 0.0
    %524 = vmatprep.subr.mxu0 0.0
    %525 = vmatpush1.msra.mxu0 0.0
    %526 = vmatprep.subr.mxu0 0.0
    %527 = vmatpush1.msra.mxu0 0.0
    %528 = vmatprep.subr.mxu0 0.0
    %529 = vmatpush1.msra.mxu0 0.0
    %530 = vmatprep.subr.mxu0 0.0
    %531 = vmatpush1.msra.mxu0 0.0
    %532 = vmatprep.subr.mxu0 0.0
    %533 = vmatpush1.msra.mxu0 0.0
    %534 = vmatprep.subr.mxu0 0.0
    %535 = vmatpush1.msra.mxu0 0.0
    %536 = vmatprep.subr.mxu0 0.0
    %537 = vmatpush1.msra.mxu0 0.0
    %538 = vmatprep.subr.mxu0 0.0
    %539 = vmatpush1.msra.mxu0 0.0
    %540 = vmatprep.subr.mxu0 0.0
    %541 = vmatpush1.msra.mxu0 0.0
    %542 = vmatprep.subr.mxu0 0.0
    %543 = vmatpush1.msra.mxu0 0.0
    %544 = vmatprep.subr.mxu0 0.0
    %545 = vmatpush1.msra.mxu0 0.0
    %546 = vmatprep.subr.mxu0 0.0
    %547 = vmatpush1.msra.mxu0 0.0
    %548 = vmatprep.subr.mxu0 0.0
    %549 = vmatpush1.msra.mxu0 0.0
    %550 = vmatprep.subr.mxu0 0.0
    %551 = vmatpush1.msra.mxu0 0.0
    %552 = vmatprep.subr.mxu0 0.0
    %553 = vmatpush1.msra.mxu0 0.0
    %554 = vmatprep.subr.mxu0 0.0
    %555 = vmatpush1.msra.mxu0 0.0
    %556 = vmatprep.subr.mxu0 0.0
    %557 = vmatpush1.msra.mxu0 0.0
    %558 = vmatprep.subr.mxu0 0.0
    %559 = vmatpush1.msra.mxu0 0.0
    %560 = vmatprep.subr.mxu0 0.0
    %561 = vmatpush1.msra.mxu0 0.0
    %562 = vmatprep.subr.mxu0 0.0
    %563 = vmatpush1.msra.mxu0 0.0
    %564 = vmatprep.mubr.f32.mxu0 0.0
    %v565 = vand.u32 %v65, 4294901760
    %566 = vmatmul.mubr.f32.gmra.mrb[0].mxu0 %v565
    %v567 = vpop.f32.mrb[0].mxu0
    %v568 = vadd.f32 %v462, %v567
    %v569 = vpop.f32.mrb[0].mxu0
    %570 = vmatprep.mubr.f32.mxu0 0.0
    %v571 = vand.u32 %v68, 4294901760
    %572 = vmatmul.mubr.f32.gmra.mrb[0].mxu0 %v571
    %v573 = vpop.f32.mrb[0].mxu0
    %v574 = vadd.f32 %v470, %v573
    %v575 = vpop.f32.mrb[0].mxu0
    %576 = vdwg.mxu0
    %577 = vmatprep.subr.mxu0 0.0
    %v578 = vand.u32 %v54, 4294901760
    %579 = vmatpush1.msra.mxu0 %v578
    %580 = vmatprep.subr.mxu0 0.0
    %v581 = vand.u32 %v55, 4294901760
    %582 = vmatpush1.msra.mxu0 %v581
    %583 = vmatprep.subr.mxu0 0.0
    %v584 = vand.u32 %v56, 4294901760
    %585 = vmatpush1.msra.mxu0 %v584
    %586 = vmatprep.subr.mxu0 0.0
    %v587 = vand.u32 %v57, 4294901760
    %588 = vmatpush1.msra.mxu0 %v587
    %589 = vmatprep.subr.mxu0 0.0
    %v590 = vand.u32 %v58, 4294901760
    %591 = vmatpush1.msra.mxu0 %v590
    %592 = vmatprep.subr.mxu0 0.0
    %v593 = vand.u32 %v59, 4294901760
    %594 = vmatpush1.msra.mxu0 %v593
    %595 = vmatprep.subr.mxu0 0.0
    %v596 = vand.u32 %v60, 4294901760
    %597 = vmatpush1.msra.mxu0 %v596
    %598 = vmatprep.subr.mxu0 0.0
    %v599 = vand.u32 %v61, 4294901760
    %600 = vmatpush1.msra.mxu0 %v599
    %601 = vmatprep.subr.mxu0 0.0
    %v602 = vand.u32 %v62, 4294901760
    %603 = vmatpush1.msra.mxu0 %v602
    %604 = vmatprep.subr.mxu0 0.0
    %605 = vmatpush1.msra.mxu0 0.0
    %606 = vmatprep.subr.mxu0 0.0
    %607 = vmatpush1.msra.mxu0 0.0
    %608 = vmatprep.subr.mxu0 0.0
    %609 = vmatpush1.msra.mxu0 0.0
    %610 = vmatprep.subr.mxu0 0.0
    %611 = vmatpush1.msra.mxu0 0.0
    %612 = vmatprep.subr.mxu0 0.0
    %613 = vmatpush1.msra.mxu0 0.0
    %614 = vmatprep.subr.mxu0 0.0
    %615 = vmatpush1.msra.mxu0 0.0
    %616 = vmatprep.subr.mxu0 0.0
    %617 = vmatpush1.msra.mxu0 0.0
    %618 = vmatprep.subr.mxu0 0.0
    %619 = vmatpush1.msra.mxu0 0.0
    %620 = vmatprep.subr.mxu0 0.0
    %621 = vmatpush1.msra.mxu0 0.0
    %622 = vmatprep.subr.mxu0 0.0
    %623 = vmatpush1.msra.mxu0 0.0
    %624 = vmatprep.subr.mxu0 0.0
    %625 = vmatpush1.msra.mxu0 0.0
    %626 = vmatprep.subr.mxu0 0.0
    %627 = vmatpush1.msra.mxu0 0.0
    %628 = vmatprep.subr.mxu0 0.0
    %629 = vmatpush1.msra.mxu0 0.0
    %630 = vmatprep.subr.mxu0 0.0
    %631 = vmatpush1.msra.mxu0 0.0
    %632 = vmatprep.subr.mxu0 0.0
    %633 = vmatpush1.msra.mxu0 0.0
    %634 = vmatprep.subr.mxu0 0.0
    %635 = vmatpush1.msra.mxu0 0.0
    %636 = vmatprep.subr.mxu0 0.0
    %637 = vmatpush1.msra.mxu0 0.0
    %638 = vmatprep.subr.mxu0 0.0
    %639 = vmatpush1.msra.mxu0 0.0
    %640 = vmatprep.subr.mxu0 0.0
    %641 = vmatpush1.msra.mxu0 0.0
    %642 = vmatprep.subr.mxu0 0.0
    %643 = vmatpush1.msra.mxu0 0.0
    %644 = vmatprep.subr.mxu0 0.0
    %645 = vmatpush1.msra.mxu0 0.0
    %646 = vmatprep.subr.mxu0 0.0
    %647 = vmatpush1.msra.mxu0 0.0
    %648 = vmatprep.subr.mxu0 0.0
    %649 = vmatpush1.msra.mxu0 0.0
    %650 = vmatprep.mubr.f32.mxu0 0.0
    %v651 = vand.u32 %v65, 4294901760
    %652 = vmatmul.mubr.f32.gmra.mrb[0].mxu0 %v651
    %v653 = vpop.f32.mrb[0].mxu0
    %v654 = vadd.f32 %v568, %v653
    %v655 = vpop.f32.mrb[0].mxu0
    %656 = vmatprep.mubr.f32.mxu0 0.0
    %v657 = vand.u32 %v68, 4294901760
    %658 = vmatmul.mubr.f32.gmra.mrb[0].mxu0 %v657
    %v659 = vpop.f32.mrb[0].mxu0
    %v660 = vadd.f32 %v574, %v659
    %v661 = vpop.f32.mrb[0].mxu0
    %662 = vdwg.mxu0
    %663 = vst [vmem:[#allocation5] sm:$0xff] %v654
    %664 = vst [vmem:[#allocation5 + $0x8] sm:$0xff] %v660
    %vm665 = vcmp.lt.s32.totalorder %v39, 65
    %v666 = vsel %vm665, %v654, -1e+30
    %v667 = vsel %vm665, %v660, -1e+30
    %668 = vmax.xlane.f32.xlu0 %v666
    %v669 = vpop.xlane.xlu0 %668
    %670 = vmax.xlane.f32.xlu0 %v667
    %v671 = vpop.xlane.xlu0 %670
    %v672 = vsub.f32 %v666, %v669
    %v673 = vsub.f32 %v667, %v671
    %v674 = vmul.f32 %v672, 1.442695
    %v675 = vpow.pop %v674
    %v676 = vmul.f32 %v673, 1.442695
    %v677 = vpow.pop %v676
    %678 = vadd.xlane.f32.xlu0 %v675
    %v679 = vpop.xlane.xlu0 %678
    %680 = vadd.xlane.f32.xlu0 %v677
    %v681 = vpop.xlane.xlu0 %680
    %v682 = vlog2.pop %v679
    %v683 = vmul.f32 %v682, 0.6931472
    %v684 = vlog2.pop %v681
    %v685 = vmul.f32 %v684, 0.6931472
    %v686 = vadd.f32 %v669, %v683
    %v687 = vadd.f32 %v671, %v685
    %v688 = vld [vmem:[%s1] sm:$0xff]
    %v689 = vld [vmem:[%s1 + $0x8] sm:$0xff]
    %690 = vset.pattern.permute.xlu0 0
    %691 = vperm.xlu0 %690, %v688
    %v692 = vpop.permute.xlu0 %691
    %693 = vset.pattern.permute.xlu0 0
    %694 = vperm.xlu0 %693, %v689
    %v695 = vpop.permute.xlu0 %694
    %vm696 = vcmp.eq.s32.totalorder %v39, %v692
    %vm697 = vcmp.eq.s32.totalorder %v39, %v695
    %v698 = vsel %vm696, %v654, 0.0
    %v699 = vsel %vm697, %v660, 0.0
    %700 = vadd.xlane.f32.xlu0 %v698
    %v701 = vpop.xlane.xlu0 %700
    %702 = vadd.xlane.f32.xlu0 %v699
    %v703 = vpop.xlane.xlu0 %702
    %v704 = vsub.f32 %v686, %v701
    %v705 = vsub.f32 %v687, %v703
    %s706 = smul.u32 0, 16
    %v707 = vlaneseq
    %v708 = vshrl.u32 %v707, 7
    %v709 = vadd.s32 %v708, 8
    %v710 = vstv %s706
    %v711 = vadd.s32 %v710, %v708
    %v712 = vadd.s32 %v710, %v709
    %vm713 = vcmp.lt.s32.totalorder %v711, 16
    %vm714 = vcmp.lt.s32.totalorder %v712, 16
    %v715 = vsel %vm713, %v704, 0.0
    %v716 = vsel %vm714, %v705, 0.0
    %v717 = vld [vmem:[#allocation6] sm:$0x1]
    %vm718 = vcmask 7168
    %v719 = vsel %vm718, %v715, 0.0
    %v720 = vsel %vm718, %v716, 0.0
    %v721 = vadd.f32 %v719, %v720
    %722 = vadd.xlane.f32.xlu0 %v721
    %v723 = vpop.xlane.xlu0 %722
    %v724 = vrot.slane %v723, 4
    %v725 = vadd.f32 %v723, %v724
    %v726 = vrot.slane %v725, 2
    %v727 = vadd.f32 %v725, %v726
    %v728 = vrot.slane %v727, 1
    %v729 = vadd.f32 %v727, %v728
    %s730 = vtos %v729
    %v731 = vstv %s730
    %v732 = vadd.f32 %v717, %v731
    %vm733 = vcmask 0
    %734 = vst.msk [vmem:[#allocation6] sm:$0x1] %vm733, %v732
    // Predicated region
    $region22: #{tpu_custom_call.1} parent=1 // pred_check
      %p735 = pneg %p32
    $region23: #{tpu_custom_call.1} parent=1 // pred_check_branch
      %737 = sbr.rel (%p735) target = $region25
    $region24: #{tpu_custom_call.1} parent=1 // pred_region
      %v738 = vld [vmem:[#allocation6] sm:$0x1]
      %v739 = vmul.f32 %v738, 0.0625
      %740 = vst.msk [vmem:[#allocation6] sm:$0x1] %vm733, %v739
    $region25: #{tpu_custom_call.1} parent=1 // pred_fallthru
      _
    // Predicated region
    $region26: #{tpu_custom_call.1} parent=1 // pred_check
      _
    $region27: #{tpu_custom_call.1} parent=1 // pred_check_branch
      %742 = sbr.rel (0) target = $region29
    $region28: #{tpu_custom_call.1} parent=1 // pred_region
      %s744 = ssub.s32 256, 256
      %745 = vsyncadd [#allocation4], %s744
      %s746 = sshll.u32 [#allocation5], 4
      %s747 = int_to_ptr.vmem [resolvable:$true] %s746
      %752 = dma.vmem_to_hbm [thread:$0]  %s747, 256, %s3, [#allocation4], 128, 128, 8
    $region29: #{tpu_custom_call.1} parent=1 // pred_fallthru
      _
    // Predicated region
    $region30: #{tpu_custom_call.1} parent=1 // pred_check
      _
    $region31: #{tpu_custom_call.1} parent=1 // pred_check_branch
      %754 = sbr.rel (0) target = $region33
    $region32: #{tpu_custom_call.1} parent=1 // pred_region
      %s756 = ssub.s32 16, 16
      %757 = vsyncadd [#allocation7], %s756
      %s759 = sshll.u32 [#allocation6], 4
      %s760 = int_to_ptr.vmem [resolvable:$true] %s759
      %762 = dma.vmem_to_hbm [thread:$0]  %s760, 16, %s4, [#allocation7]
    $region33: #{tpu_custom_call.1} parent=1 // pred_fallthru
      _
    // Predicated region
    $region34: #{tpu_custom_call.1} parent=1 // pred_check
      _
    $region35: #{tpu_custom_call.1} parent=1 // pred_check_branch
      %764 = sbr.rel (0) target = $region37
    $region36: #{tpu_custom_call.1} parent=1 // pred_region
      %765 = dma.done [#allocation4], 256
    $region37: #{tpu_custom_call.1} parent=1 // pred_fallthru
      _
    // Predicated region
    $region38: #{tpu_custom_call.1} parent=1 // pred_check
      _
    $region39: #{tpu_custom_call.1} parent=1 // pred_check_branch
      %767 = sbr.rel (0) target = $region41
    $region40: #{tpu_custom_call.1} parent=1 // pred_region
      %768 = dma.done [#allocation7], 16
    $region41: #{tpu_custom_call.1} parent=1 // pred_fallthru
      _
    %769 = vsyncpa [#allocation3], 1
    %770 = vsyncpa [#allocation4], 1
    %771 = vsyncpa [#allocation7], 1

</llo_original>
